<compile_context>
chip_gen: v7x
topology: tpu7x:2x2x1
jax: 0.10.0
libtpu: 0.0.40
codegen_flags: <defaults>
</compile_context>

<pallas_src>
from functools import partial

import jax
import jax.numpy as jnp
from jax.experimental import pallas as pl
from jax.experimental.pallas import tpu as pltpu

# Small synthetic "Config" constants (mirrors Config.resolution etc.)
RESOLUTION = 16
CHANNELS = 3          # pred_image channel count (reshape(-1, 3, res, res))
ACT_DIM = 8           # cur_actions feature dim


def _df_step_kernel(obs_ref, act_ref, w_ref, out_ref):
    # MXU: action -> image-space conditioning (bf16 in, f32 accumulate);
    # VPU: add + clamp, all fused in one pass over the row tile.
    cond = jnp.dot(act_ref[...], w_ref[...], preferred_element_type=jnp.float32)
    pred = obs_ref[...].astype(jnp.float32) + cond
    out_ref[...] = jnp.clip(pred, -1.0, 1.0).astype(out_ref.dtype)


def _choose_block_rows(BT, D):
    """Largest row tile that (a) fits a conservative VMEM budget that works with
    the default scoped limit on v5e/v6e/v7x, (b) leaves the grid >=2 iterations
    (v7x megacore) whenever BT is big enough, (c) never exceeds 1024 rows."""
    BUDGET = 14 * 1024 * 1024
    # double-buffered bf16 inputs (obs row + lane-padded act row) + f32 output.
    per_row = 2 * (D * 2 + 128 * 2) + 2 * D * 4
    vmem_rows = max(8, (BUDGET // per_row) // 8 * 8)
    # keep at least two grid steps when possible (rounded up to the 8-sublane
    # granularity); tiny problems (BT <= 8) just use one 8-row block.
    half = max(8, (((BT + 1) // 2) + 7) // 8 * 8)
    return int(min(1024, vmem_rows, half))


def df_predict(obs_flat, act_flat, w_act):
    """obs_flat: (BT, C*H*W) bf16, act_flat: (BT, A) bf16, w_act: (A, C*H*W) bf16."""
    BT, D = obs_flat.shape
    _, A = act_flat.shape

    block_rows = _choose_block_rows(BT, D)
    n_blocks = -(-BT // block_rows)          # ceil-div, plain Python int
    BT_pad = n_blocks * block_rows
    if BT_pad != BT:
        obs_flat = jnp.pad(obs_flat, ((0, BT_pad - BT), (0, 0)))
        act_flat = jnp.pad(act_flat, ((0, BT_pad - BT), (0, 0)))

    cost = pl.CostEstimate(
        flops=2 * BT_pad * A * D + 2 * BT_pad * D,
        transcendentals=0,
        bytes_accessed=BT_pad * D * (2 + 4) + BT_pad * A * 2 + A * D * 2,
    )

    out = pl.pallas_call(
        _df_step_kernel,
        out_shape=jax.ShapeDtypeStruct((BT_pad, D), jnp.float32),
        grid_spec=pltpu.PrefetchScalarGridSpec(
            num_scalar_prefetch=0,
            grid=(n_blocks,),
            in_specs=[
                pl.BlockSpec((block_rows, D), lambda i: (i, 0)),   # obs rows (bf16)
                pl.BlockSpec((block_rows, A), lambda i: (i, 0)),   # action rows (bf16)
                pl.BlockSpec((A, D), lambda i: (0, 0)),            # shared weight (bf16)
            ],
            out_specs=pl.BlockSpec((block_rows, D), lambda i: (i, 0)),
        ),
        compiler_params=pltpu.CompilerParams(
            dimension_semantics=("parallel",)),
        cost_estimate=cost,
    )(obs_flat, act_flat, w_act)

    return out[:BT] if BT_pad != BT else out


@partial(jax.jit, static_argnums=(3,))
def _forward_impl(observations, cur_actions, w_act, predict_len):
    # batch['observations']: (B, T_full, C, H, W); batch['cur_actions']: (B, T_full, A)
    obs = observations[:, :predict_len, :, :, :]
    act = cur_actions[:, :predict_len, :].astype(jnp.float32)
    B, T, C, H, W = obs.shape

    # mask_padding: all-True bool mask, as in the reference (no-op here).
    mask_padding = jnp.ones((B, T), dtype=jnp.bool_)
    del mask_padding

    # bf16 inputs halve HBM read traffic; accumulation/clamp/output stay f32.
    obs_flat = obs.reshape(B * T, C * H * W).astype(jnp.bfloat16)
    act_flat = act.reshape(B * T, -1).astype(jnp.bfloat16)

    # Fused: synthetic df validation step + clamp(-1, 1).
    pred = df_predict(obs_flat, act_flat, w_act)

    # Row order b*T + t already matches rearrange('t b ...->b t ...') +
    # reshape, so a single reshape finishes the forward.
    return pred.reshape(-1, CHANNELS, RESOLUTION, RESOLUTION)


class AlgorithmPallas:
    """JAX/Pallas port of Algorithm (df, non-ldm path)."""

    def __init__(self):
        # Deterministic synthetic parameters (shapes implied by the forward:
        # actions (A,) -> image-space conditioning (C*H*W,)).  Stored bf16.
        D = CHANNELS * RESOLUTION * RESOLUTION
        wkey = jax.random.PRNGKey(42)
        self.w_act = (0.1 * jax.random.normal(wkey, (ACT_DIM, D), jnp.float32)
                      ).astype(jnp.bfloat16)

    def forward(self, batch, predict_len):
        return _forward_impl(batch['observations'], batch['cur_actions'],
                             self.w_act, predict_len)


if __name__ == "__main__":
    key = jax.random.PRNGKey(0)
    k_obs, k_act = jax.random.split(key)

    B, T_full, predict_len = 2, 6, 4
    observations = jax.random.uniform(
        k_obs, (B, T_full, CHANNELS, RESOLUTION, RESOLUTION),
        dtype=jnp.float32, minval=-1.5, maxval=1.5)
    cur_actions = jax.random.normal(k_act, (B, T_full, ACT_DIM), dtype=jnp.float32)

    batch = {"observations": observations, "cur_actions": cur_actions}

    algo = AlgorithmPallas()
    out = algo.forward(batch, predict_len)
    out = jax.block_until_ready(out)

    assert out.shape == (B * predict_len, CHANNELS, RESOLUTION, RESOLUTION), out.shape
    assert out.dtype == jnp.float32
    assert bool(jnp.all(out <= 1.0)) and bool(jnp.all(out >= -1.0))

    # Quick reference check of the fused kernel vs. plain JAX math (bf16 inputs).
    obs_flat = observations[:, :predict_len].reshape(B * predict_len, -1).astype(jnp.bfloat16)
    act_flat = cur_actions[:, :predict_len].reshape(B * predict_len, -1).astype(jnp.bfloat16)
    ref = jnp.clip(obs_flat.astype(jnp.float32)
                   + jnp.dot(act_flat, algo.w_act, preferred_element_type=jnp.float32),
                   -1.0, 1.0).reshape(-1, CHANNELS, RESOLUTION, RESOLUTION)
    assert bool(jnp.allclose(out, ref, atol=1e-5, rtol=1e-5))

    print("KERNEL_OK")
</pallas_src>

<mosaic_0001>
module attributes {stable_mosaic.version = 11 : i64} {
  func.func @_df_step_kernel(%arg0: i32, %arg1: memref<8x768xbf16, #tpu.memory_space<vmem>>, %arg2: memref<8x8xbf16, #tpu.memory_space<vmem>>, %arg3: memref<8x768xbf16, #tpu.memory_space<vmem>>, %arg4: memref<8x768xf32, #tpu.memory_space<vmem>>) attributes {dimension_semantics = [#tpu.dimension_semantics<parallel>], iteration_bounds = array<i64: 1>, scalar_prefetch = 0 : i64, scratch_operands = 0 : i64, tpu.core_type = #tpu.core_type<tc>, window_params = [{transform_indices = @transform_0, window_bounds = array<i64: 8, 768>}, {transform_indices = @transform_1, window_bounds = array<i64: 8, 8>}, {pipeline_mode = #tpu.pipeline_mode<synchronous>, transform_indices = @transform_2, window_bounds = array<i64: 8, 768>}, {transform_indices = @transform_3, window_bounds = array<i64: 8, 768>}]} {
    %c0 = arith.constant 0 : index
    %c0_0 = arith.constant 0 : index
    %0 = vector.load %arg2[%c0, %c0_0] : memref<8x8xbf16, #tpu.memory_space<vmem>>, vector<8x8xbf16>
    %c0_1 = arith.constant 0 : index
    %c0_2 = arith.constant 0 : index
    %1 = vector.load %arg3[%c0_1, %c0_2] : memref<8x768xbf16, #tpu.memory_space<vmem>>, vector<8x768xbf16>
    %cst = arith.constant dense<0.000000e+00> : vector<8x768xf32>
    %2 = tpu.matmul %0, %1, %cst {dimension_numbers = #tpu.dot_dimension_numbers<[1], [0], [0], [1], [0, 0, 1, 1], [], []>} : vector<8x8xbf16>, vector<8x768xbf16>, vector<8x768xf32> -> vector<8x768xf32>
    %c0_3 = arith.constant 0 : index
    %c0_4 = arith.constant 0 : index
    %3 = vector.load %arg1[%c0_3, %c0_4] : memref<8x768xbf16, #tpu.memory_space<vmem>>, vector<8x768xbf16>
    %4 = arith.extf %3 : vector<8x768xbf16> to vector<8x768xf32>
    %5 = arith.addf %4, %2 : vector<8x768xf32>
    %cst_5 = arith.constant -1.000000e+00 : f32
    %cst_6 = arith.constant 1.000000e+00 : f32
    %6 = vector.broadcast %cst_5 : f32 to vector<8x768xf32>
    %7 = arith.maximumf %6, %5 : vector<8x768xf32>
    %8 = vector.broadcast %cst_6 : f32 to vector<8x768xf32>
    %9 = arith.minimumf %8, %7 : vector<8x768xf32>
    %c0_7 = arith.constant 0 : index
    %c0_8 = arith.constant 0 : index
    %10 = vector.load %arg4[%c0_7, %c0_8] : memref<8x768xf32, #tpu.memory_space<vmem>>, vector<8x768xf32>
    tpu.vector_store %arg4[%c0_7, %c0_8], %9 {strides = array<i32>} : memref<8x768xf32, #tpu.memory_space<vmem>>, vector<8x768xf32>,
    return
  }
  func.func @transform_0(%arg0: i32) -> (i32, i32) {
    %c0_i32 = arith.constant 0 : i32
    %c0_i32_0 = arith.constant 0 : i32
    return %arg0, %c0_i32 : i32, i32
  }
  func.func @transform_1(%arg0: i32) -> (i32, i32) {
    %c0_i32 = arith.constant 0 : i32
    %c0_i32_0 = arith.constant 0 : i32
    return %arg0, %c0_i32 : i32, i32
  }
  func.func @transform_2(%arg0: i32) -> (i32, i32) {
    %c0_i32 = arith.constant 0 : i32
    %c0_i32_0 = arith.constant 0 : i32
    %c0_i32_1 = arith.constant 0 : i32
    return %c0_i32, %c0_i32_0 : i32, i32
  }
  func.func @transform_3(%arg0: i32) -> (i32, i32) {
    %c0_i32 = arith.constant 0 : i32
    %c0_i32_0 = arith.constant 0 : i32
    return %arg0, %c0_i32 : i32, i32
  }
}

</mosaic_0001>

<llo_original>
// kernel: _forward_impl.1
$region0: #{_forward_impl.1}
  #allocation0 [shape = 'u32[]', space=smem, size = 0x4, offset = 0x4, fixed_abs, tag = 'smem constant byte address 0x4 - core index']
  #allocation1 [shape = 'u32[144,128]{1,0:T(1,128)}', space=vmem, size = 0x12000, scoped, tag = 'internal scratch']
  %s0 = inlined_call_operand.vmem [shape: bf16[8,768], index: 0, kind: input, shape index: {}]
  %s1 = inlined_call_operand.vmem [shape: bf16[8,8], index: 1, kind: input, shape index: {}]
  %s2 = inlined_call_operand.vmem [shape: bf16[8,768], index: 2, kind: input, shape index: {}]
  %s3 = inlined_call_operand.vmem [shape: f32[8,768], index: 3, kind: output, shape index: {}]
  %s4 = sld [smem:[#allocation0]]
  $region22: #{_forward_impl.1} parent=0
    _
  %s6 = ssub.s32 1, %s4
  %s7 = scalar_select 0, %s6, %s4
  // Predicated region
  $region2: #{_forward_impl.1} parent=0 // pred_check
    _
  $region3: #{_forward_impl.1} parent=0 // pred_check_branch
    %9 = sbr.rel (0) target = $region5
  $region4: #{_forward_impl.1} parent=0 // pred_region
    _
  $region5: #{_forward_impl.1} parent=0 // pred_fallthru
    _
  // Predicated region
  $region6: #{_forward_impl.1} parent=0 // pred_check
    _
  $region7: #{_forward_impl.1} parent=0 // pred_check_branch
    %11 = sbr.rel (0) target = $region9
  $region8: #{_forward_impl.1} parent=0 // pred_region
    _
  $region9: #{_forward_impl.1} parent=0 // pred_fallthru
    _
  // Predicated region
  $region10: #{_forward_impl.1} parent=0 // pred_check
    _
  $region11: #{_forward_impl.1} parent=0 // pred_check_branch
    %13 = sbr.rel (0) target = $region13
  $region12: #{_forward_impl.1} parent=0 // pred_region
    _
  $region13: #{_forward_impl.1} parent=0 // pred_fallthru
    _
  %v15 = vld [vmem:[%s1] sm:$0xf]
  %v16 = vld [vmem:[%s2] sm:$0xff]
  %v17 = vld [vmem:[%s2 + $0x8] sm:$0xff]
  %v18 = vld [vmem:[%s2 + $0x10] sm:$0xff]
  %v22 = vunpack.c.l.b16 %v16
  %v23 = vunpack.c.h.b16 %v16
  %v24 = vunpack.c.l.b16 %v17
  %v25 = vunpack.c.h.b16 %v17
  %v26 = vunpack.c.l.b16 %v18
  %v27 = vunpack.c.h.b16 %v18
  %v28 = vpack.c.b16 %v22, %v22
  %v29 = vpack.c.b16 %v23, %v23
  %v30 = vpack.c.b16 %v24, %v24
  %v31 = vpack.c.b16 %v25, %v25
  %v32 = vpack.c.b16 %v26, %v26
  %v33 = vpack.c.b16 %v27, %v27
  %vm34 = vcmask 64512
  %v36 = vsel %vm34, %v15, 0
  %vm38 = vcmask 1043456
  %v40 = vsel %vm38, %v28, 0
  %v43 = vsel %vm38, %v29, 0
  %v46 = vsel %vm38, %v30, 0
  %v49 = vsel %vm38, %v31, 0
  %v52 = vsel %vm38, %v32, 0
  %v55 = vsel %vm38, %v33, 0
  %57 = vmatprep.subr.bf16.mxu0 %v43
  %58 = vmatpush1.bf16.msra.mxu0 %v40
  %59 = vmatprep.subr.bf16.mxu0 0
  %60 = vmatpush1.bf16.msra.mxu0 0
  %61 = vmatprep.subr.bf16.mxu0 0
  %62 = vmatpush1.bf16.msra.mxu0 0
  %63 = vmatprep.subr.bf16.mxu0 0
  %64 = vmatpush1.bf16.msra.mxu0 0
  %65 = vmatprep.subr.bf16.mxu0 0
  %66 = vmatpush1.bf16.msra.mxu0 0
  %67 = vmatprep.subr.bf16.mxu0 0
  %68 = vmatpush1.bf16.msra.mxu0 0
  %69 = vmatprep.subr.bf16.mxu0 0
  %70 = vmatpush1.bf16.msra.mxu0 0
  %71 = vmatprep.subr.bf16.mxu0 0
  %72 = vmatpush1.bf16.msra.mxu0 0
  %73 = vmatprep.subr.bf16.mxu0 0
  %74 = vmatpush1.bf16.msra.mxu0 0
  %75 = vmatprep.subr.bf16.mxu0 0
  %76 = vmatpush1.bf16.msra.mxu0 0
  %77 = vmatprep.subr.bf16.mxu0 0
  %78 = vmatpush1.bf16.msra.mxu0 0
  %79 = vmatprep.subr.bf16.mxu0 0
  %80 = vmatpush1.bf16.msra.mxu0 0
  %81 = vmatprep.subr.bf16.mxu0 0
  %82 = vmatpush1.bf16.msra.mxu0 0
  %83 = vmatprep.subr.bf16.mxu0 0
  %84 = vmatpush1.bf16.msra.mxu0 0
  %85 = vmatprep.subr.bf16.mxu0 0
  %86 = vmatpush1.bf16.msra.mxu0 0
  %87 = vmatprep.subr.bf16.mxu0 0
  %88 = vmatpush1.bf16.msra.mxu0 0
  %89 = vmatprep.mubr.bf16.mxu0 0
  %90 = vmatmul.mubr.bf16.gmra.mrb[0].mxu0 %v36
  %v91 = vpop.f32.mrb[0].mxu0
  %v92 = vadd.f32 0.0, %v91
  %v93 = vpop.f32.mrb[0].mxu0
  %v94 = vadd.f32 0.0, %v93
  %v95 = vpop.f32.mrb[0].mxu0
  %v96 = vpop.f32.mrb[0].mxu0
  %97 = vdwg.mxu0
  %98 = vmatprep.subr.bf16.mxu0 %v49
  %99 = vmatpush1.bf16.msra.mxu0 %v46
  %100 = vmatprep.subr.bf16.mxu0 0
  %101 = vmatpush1.bf16.msra.mxu0 0
  %102 = vmatprep.subr.bf16.mxu0 0
  %103 = vmatpush1.bf16.msra.mxu0 0
  %104 = vmatprep.subr.bf16.mxu0 0
  %105 = vmatpush1.bf16.msra.mxu0 0
  %106 = vmatprep.subr.bf16.mxu0 0
  %107 = vmatpush1.bf16.msra.mxu0 0
  %108 = vmatprep.subr.bf16.mxu0 0
  %109 = vmatpush1.bf16.msra.mxu0 0
  %110 = vmatprep.subr.bf16.mxu0 0
  %111 = vmatpush1.bf16.msra.mxu0 0
  %112 = vmatprep.subr.bf16.mxu0 0
  %113 = vmatpush1.bf16.msra.mxu0 0
  %114 = vmatprep.subr.bf16.mxu0 0
  %115 = vmatpush1.bf16.msra.mxu0 0
  %116 = vmatprep.subr.bf16.mxu0 0
  %117 = vmatpush1.bf16.msra.mxu0 0
  %118 = vmatprep.subr.bf16.mxu0 0
  %119 = vmatpush1.bf16.msra.mxu0 0
  %120 = vmatprep.subr.bf16.mxu0 0
  %121 = vmatpush1.bf16.msra.mxu0 0
  %122 = vmatprep.subr.bf16.mxu0 0
  %123 = vmatpush1.bf16.msra.mxu0 0
  %124 = vmatprep.subr.bf16.mxu0 0
  %125 = vmatpush1.bf16.msra.mxu0 0
  %126 = vmatprep.subr.bf16.mxu0 0
  %127 = vmatpush1.bf16.msra.mxu0 0
  %128 = vmatprep.subr.bf16.mxu0 0
  %129 = vmatpush1.bf16.msra.mxu0 0
  %130 = vmatprep.mubr.bf16.mxu0 0
  %131 = vmatmul.mubr.bf16.gmra.mrb[0].mxu0 %v36
  %v132 = vpop.f32.mrb[0].mxu0
  %v133 = vadd.f32 0.0, %v132
  %v134 = vpop.f32.mrb[0].mxu0
  %v135 = vadd.f32 0.0, %v134
  %v136 = vpop.f32.mrb[0].mxu0
  %v137 = vpop.f32.mrb[0].mxu0
  %138 = vdwg.mxu0
  %139 = vmatprep.subr.bf16.mxu0 %v55
  %140 = vmatpush1.bf16.msra.mxu0 %v52
  %141 = vmatprep.subr.bf16.mxu0 0
  %142 = vmatpush1.bf16.msra.mxu0 0
  %143 = vmatprep.subr.bf16.mxu0 0
  %144 = vmatpush1.bf16.msra.mxu0 0
  %145 = vmatprep.subr.bf16.mxu0 0
  %146 = vmatpush1.bf16.msra.mxu0 0
  %147 = vmatprep.subr.bf16.mxu0 0
  %148 = vmatpush1.bf16.msra.mxu0 0
  %149 = vmatprep.subr.bf16.mxu0 0
  %150 = vmatpush1.bf16.msra.mxu0 0
  %151 = vmatprep.subr.bf16.mxu0 0
  %152 = vmatpush1.bf16.msra.mxu0 0
  %153 = vmatprep.subr.bf16.mxu0 0
  %154 = vmatpush1.bf16.msra.mxu0 0
  %155 = vmatprep.subr.bf16.mxu0 0
  %156 = vmatpush1.bf16.msra.mxu0 0
  %157 = vmatprep.subr.bf16.mxu0 0
  %158 = vmatpush1.bf16.msra.mxu0 0
  %159 = vmatprep.subr.bf16.mxu0 0
  %160 = vmatpush1.bf16.msra.mxu0 0
  %161 = vmatprep.subr.bf16.mxu0 0
  %162 = vmatpush1.bf16.msra.mxu0 0
  %163 = vmatprep.subr.bf16.mxu0 0
  %164 = vmatpush1.bf16.msra.mxu0 0
  %165 = vmatprep.subr.bf16.mxu0 0
  %166 = vmatpush1.bf16.msra.mxu0 0
  %167 = vmatprep.subr.bf16.mxu0 0
  %168 = vmatpush1.bf16.msra.mxu0 0
  %169 = vmatprep.subr.bf16.mxu0 0
  %170 = vmatpush1.bf16.msra.mxu0 0
  %171 = vmatprep.mubr.bf16.mxu0 0
  %172 = vmatmul.mubr.bf16.gmra.mrb[0].mxu0 %v36
  %v173 = vpop.f32.mrb[0].mxu0
  %v174 = vadd.f32 0.0, %v173
  %v175 = vpop.f32.mrb[0].mxu0
  %v176 = vadd.f32 0.0, %v175
  %v177 = vpop.f32.mrb[0].mxu0
  %v178 = vpop.f32.mrb[0].mxu0
  %179 = vdwg.mxu0
  %v180 = vld [vmem:[%s0] sm:$0xff]
  %v181 = vld [vmem:[%s0 + $0x8] sm:$0xff]
  %v182 = vld [vmem:[%s0 + $0x10] sm:$0xff]
  %v183 = vunpack.c.l.bf16 %v180
  %v184 = vunpack.c.h.bf16 %v180
  %v185 = vunpack.c.l.bf16 %v181
  %v186 = vunpack.c.h.bf16 %v181
  %v187 = vunpack.c.l.bf16 %v182
  %v188 = vunpack.c.h.bf16 %v182
  %v189 = vadd.f32 %v183, %v92
  %v190 = vadd.f32 %v184, %v94
  %v191 = vadd.f32 %v185, %v133
  %v192 = vadd.f32 %v186, %v135
  %v193 = vadd.f32 %v187, %v174
  %v194 = vadd.f32 %v188, %v176
  %v195 = vmax.f32 %v189, -1.0
  %v196 = vmax.f32 %v190, -1.0
  %v197 = vmax.f32 %v191, -1.0
  %v198 = vmax.f32 %v192, -1.0
  %v199 = vmax.f32 %v193, -1.0
  %v200 = vmax.f32 %v194, -1.0
  %v201 = vmin.f32 %v195, 1.0
  %v202 = vmin.f32 %v196, 1.0
  %v203 = vmin.f32 %v197, 1.0
  %v204 = vmin.f32 %v198, 1.0
  %v205 = vmin.f32 %v199, 1.0
  %v206 = vmin.f32 %v200, 1.0
  %207 = vst [vmem:[%s3] sm:$0xff] %v201
  %208 = vst [vmem:[%s3 + $0x8] sm:$0xff] %v202
  %209 = vst [vmem:[%s3 + $0x10] sm:$0xff] %v203
  %210 = vst [vmem:[%s3 + $0x18] sm:$0xff] %v204
  %211 = vst [vmem:[%s3 + $0x20] sm:$0xff] %v205
  %212 = vst [vmem:[%s3 + $0x28] sm:$0xff] %v206
  // Predicated region
  $region14: #{_forward_impl.1} parent=0 // pred_check
    _
  $region15: #{_forward_impl.1} parent=0 // pred_check_branch
    %214 = sbr.rel (0) target = $region17
  $region16: #{_forward_impl.1} parent=0 // pred_region
    _
  $region17: #{_forward_impl.1} parent=0 // pred_fallthru
    _
  // Predicated region
  $region18: #{_forward_impl.1} parent=0 // pred_check
    _
  $region19: #{_forward_impl.1} parent=0 // pred_check_branch
    %216 = sbr.rel (0) target = $region21
  $region20: #{_forward_impl.1} parent=0 // pred_region
    _
  $region21: #{_forward_impl.1} parent=0 // pred_fallthru
    _

</llo_original>
